<compile_context>
chip_gen: v6e
topology: v6e:2x2x1
jax: 0.10.0
libtpu: 0.0.40
codegen_flags: <defaults>
</compile_context>

<pallas_src>
import functools

import jax
import jax.numpy as jnp
from jax.experimental import pallas as pl
from jax.experimental.pallas import tpu as pltpu

LANES = 128
SUBLANES = 8


def _mse_small_kernel(p_ref, t_ref, o_ref, *, inv_n):
    """Whole-array MSE in a single block (no grid)."""
    d = p_ref[...].astype(jnp.float32) - t_ref[...].astype(jnp.float32)
    o_ref[0, 0] = jnp.sum(d * d) * jnp.float32(inv_n)


def _mse_tiled_kernel(p_ref, t_ref, o_ref, acc_ref, *, inv_n, rows, block_rows):
    """Streaming MSE over a 1-D grid with an (8,128) VMEM vector accumulator."""
    i = pl.program_id(0)
    last = pl.num_programs(0) - 1

    @pl.when(i == 0)
    def _():
        acc_ref[...] = jnp.zeros_like(acc_ref)

    d = p_ref[...].astype(jnp.float32) - t_ref[...].astype(jnp.float32)
    sq = d * d

    def _accumulate(vals):
        # Layout-preserving reshape; sum over the leading dim is pure VPU adds.
        acc_ref[...] += vals.reshape(
            block_rows // SUBLANES, SUBLANES, LANES).sum(axis=0)

    if rows % block_rows != 0:
        # Ragged grid: keep the hot (full) blocks mask-free, only the final
        # partial block masks the rows that lie past the end of the array.
        @pl.when(i != last)
        def _():
            _accumulate(sq)

        @pl.when(i == last)
        def _():
            row = i * block_rows + jax.lax.broadcasted_iota(
                jnp.int32, (block_rows, LANES), 0)
            _accumulate(jnp.where(row < rows, sq, 0.0))
    else:
        _accumulate(sq)

    @pl.when(i == last)
    def _():
        o_ref[0, 0] = jnp.sum(acc_ref[...]) * jnp.float32(inv_n)


def consistency_loss(predict, target, *, block_rows=2048):
    """MSE loss (mean reduction) between two same-shaped arrays."""
    assert predict.shape == target.shape, "predict/target shape mismatch"
    n = predict.size
    inv_n = 1.0 / float(n)

    # Flatten to a lane-dense [rows, 128] slab. Pad only the ragged lane tail
    # (< 128 elems of zeros, which contribute 0 to the squared-error sum).
    p = predict.reshape(-1)
    t = target.reshape(-1)
    rows = pl.cdiv(n, LANES)
    if n % LANES != 0:
        pad = rows * LANES - n
        p = jnp.pad(p, (0, pad))
        t = jnp.pad(t, (0, pad))
    p2 = p.reshape(rows, LANES)
    t2 = t.reshape(rows, LANES)

    # Tile height: multiple of 8 sublanes (2048 rows -> 1 MiB f32 per block).
    block_rows = max(SUBLANES, (int(block_rows) // SUBLANES) * SUBLANES)

    if rows <= block_rows:
        # Small-input fast path: whole arrays as a single block, no pipeline.
        out = pl.pallas_call(
            functools.partial(_mse_small_kernel, inv_n=inv_n),
            out_shape=jax.ShapeDtypeStruct((1, 1), jnp.float32),
            in_specs=[
                pl.BlockSpec(memory_space=pltpu.VMEM),
                pl.BlockSpec(memory_space=pltpu.VMEM),
            ],
            out_specs=pl.BlockSpec(memory_space=pltpu.SMEM),
        )(p2, t2)
        return out[0, 0]

    grid = (pl.cdiv(rows, block_rows),)
    kernel = functools.partial(
        _mse_tiled_kernel, inv_n=inv_n, rows=rows, block_rows=block_rows)

    out = pl.pallas_call(
        kernel,
        out_shape=jax.ShapeDtypeStruct((1, 1), jnp.float32),
        grid_spec=pltpu.PrefetchScalarGridSpec(
            num_scalar_prefetch=0,
            grid=grid,
            in_specs=[
                pl.BlockSpec((block_rows, LANES), lambda i: (i, 0)),
                pl.BlockSpec((block_rows, LANES), lambda i: (i, 0)),
            ],
            out_specs=pl.BlockSpec(
                (1, 1), lambda i: (0, 0), memory_space=pltpu.SMEM),
            scratch_shapes=[pltpu.VMEM((SUBLANES, LANES), jnp.float32)],
        ),
        compiler_params=pltpu.CompilerParams(
            dimension_semantics=("arbitrary",),
        ),
    )(p2, t2)
    return out[0, 0]


if __name__ == "__main__":
    key = jax.random.PRNGKey(0)
    k1, k2, k3, k4, k5, k6 = jax.random.split(key, 6)

    # Primary case: small NCHW feature maps, like the PyTorch module's caller.
    shape = (2, 4, 16, 16)
    predict = jax.random.normal(k1, shape, dtype=jnp.float32)
    target = jax.random.normal(k2, shape, dtype=jnp.float32)
    loss = jax.block_until_ready(consistency_loss(predict, target))
    ref = jnp.mean((predict - target) ** 2)
    assert jnp.allclose(loss, ref, rtol=1e-5, atol=1e-6), (loss, ref)

    # Exercise the tiled streaming path (evenly divisible rows).
    shape_b = (8, 16, 64, 64)  # 524288 elems -> rows=4096, grid=2
    pb = jax.random.normal(k3, shape_b, dtype=jnp.float32)
    tb = jax.random.normal(k4, shape_b, dtype=jnp.float32)
    loss_b = jax.block_until_ready(consistency_loss(pb, tb))
    ref_b = jnp.mean((pb - tb) ** 2)
    assert jnp.allclose(loss_b, ref_b, rtol=1e-5, atol=1e-6), (loss_b, ref_b)

    # Exercise the ragged path (lane-pad + masked final block).
    shape_c = (3, 5, 99, 211)  # 313335 elems -> rows=2448, grid=2, ragged
    pc = jax.random.normal(k5, shape_c, dtype=jnp.float32)
    tc = jax.random.normal(k6, shape_c, dtype=jnp.float32)
    loss_c = jax.block_until_ready(consistency_loss(pc, tc))
    ref_c = jnp.mean((pc - tc) ** 2)
    assert jnp.allclose(loss_c, ref_c, rtol=1e-5, atol=1e-6), (loss_c, ref_c)

    print("KERNEL_OK")
</pallas_src>

<mosaic_0001>
module attributes {stable_mosaic.version = 11 : i64} {
  func.func @_mse_small_kernel(%arg0: memref<16x128xf32, #tpu.memory_space<vmem>>, %arg1: memref<16x128xf32, #tpu.memory_space<vmem>>, %arg2: memref<1x1xf32, #tpu.memory_space<smem>>) attributes {dimension_semantics = [], scalar_prefetch = 0 : i64, scratch_operands = 0 : i64, tpu.core_type = #tpu.core_type<tc>} {
    %c0 = arith.constant 0 : index
    %c0_0 = arith.constant 0 : index
    %0 = vector.load %arg0[%c0, %c0_0] : memref<16x128xf32, #tpu.memory_space<vmem>>, vector<16x128xf32>
    %c0_1 = arith.constant 0 : index
    %c0_2 = arith.constant 0 : index
    %1 = vector.load %arg1[%c0_1, %c0_2] : memref<16x128xf32, #tpu.memory_space<vmem>>, vector<16x128xf32>
    %2 = arith.subf %0, %1 : vector<16x128xf32>
    %3 = arith.mulf %2, %2 : vector<16x128xf32>
    %4 = vector.shape_cast %3 : vector<16x128xf32> to vector<1x16x128xf32>
    %cst = arith.constant dense<0.000000e+00> : vector<1xf32>
    %5 = vector.multi_reduction <add>, %4, %cst [1, 2] : vector<1x16x128xf32> to vector<1xf32>
    %6 = vector.shape_cast %5 : vector<1xf32> to vector<1x1x1xf32>
    %7 = vector.extract %6[0, 0, 0] : f32 from vector<1x1x1xf32>
    %cst_3 = arith.constant 4.8828125E-4 : f32
    %8 = arith.mulf %7, %cst_3 : f32
    %c0_4 = arith.constant 0 : index
    %c0_5 = arith.constant 0 : index
    %9 = memref.load %arg2[%c0_4, %c0_5] : memref<1x1xf32, #tpu.memory_space<smem>>
    memref.store %8, %arg2[%c0_4, %c0_5] : memref<1x1xf32, #tpu.memory_space<smem>>
    return
  }
}

</mosaic_0001>

<llo_original>
// kernel: tpu_custom_call.1
$region0: #{tpu_custom_call.1}
  #allocation0 [shape = 'u32[]', space=smem, size = 0x4, offset = 0x4, fixed_abs, tag = 'smem constant byte address 0x4 - core index']
  #allocation1 [shape = 'u32[144,128]{1,0:T(1,128)}', space=vmem, size = 0x12000, scoped, tag = 'internal scratch']
  %s0 = inlined_call_operand.hbm [shape: f32[16,128], index: 0, kind: input, shape index: {}]
  %s1 = inlined_call_operand.hbm [shape: f32[16,128], index: 1, kind: input, shape index: {}]
  %s2 = inlined_call_operand.hbm [shape: f32[1,1], index: 2, kind: output, shape index: {}]
  %s3 = sld [smem:[#allocation0]]
  $region26: #{tpu_custom_call.1} parent=0
    _
  %s5 = ssub.s32 1, %s3
  %s6 = scalar_select 0, %s5, %s3
  $region1: #{tpu_custom_call.1} parent=0
    #allocation2 [shape = 'u8[8192]{0}', space=vmem, size = 0x2000, scoped, tag = 'input window, operand 0, single buffered']
    #allocation3 [shape = 's32[1]{0}', space=sflag, size = 0x4, scoped, tag = 'scoped memory for tpu_custom_call.1']
    #allocation4 [shape = 's32[1]{0}', space=sflag, size = 0x4, scoped, tag = 'scoped memory for tpu_custom_call.1']
    #allocation5 [shape = 'u8[8192]{0}', space=vmem, size = 0x2000, scoped, tag = 'input window, operand 1, single buffered']
    #allocation6 [shape = 's32[1]{0}', space=sflag, size = 0x4, scoped, tag = 'scoped memory for tpu_custom_call.1']
    #allocation7 [shape = 'u8[512]{0}', space=smem, size = 0x200, scoped, tag = 'output window, operand 0, single buffered']
    %7 = vsyncpa [#allocation3], 0
    %8 = vsyncpa [#allocation6], 0
    %9 = vsyncpa [#allocation4], 0
    // Predicated region
    $region2: #{tpu_custom_call.1} parent=1 // pred_check
      _
    $region3: #{tpu_custom_call.1} parent=1 // pred_check_branch
      %11 = sbr.rel (0) target = $region5
    $region4: #{tpu_custom_call.1} parent=1 // pred_region
      %s13 = ssub.s32 256, 256
      %14 = vsyncadd [#allocation3], %s13
      %s15 = sshll.u32 [#allocation2], 4
      %s16 = int_to_ptr.vmem [resolvable:$true] %s15
      %21 = dma.hbm_to_vmem [thread:$0]  %s0, 256, %s16, [#allocation3], 128, 128, 8
    $region5: #{tpu_custom_call.1} parent=1 // pred_fallthru
      _
    // Predicated region
    $region6: #{tpu_custom_call.1} parent=1 // pred_check
      _
    $region7: #{tpu_custom_call.1} parent=1 // pred_check_branch
      %23 = sbr.rel (0) target = $region9
    $region8: #{tpu_custom_call.1} parent=1 // pred_region
      %s25 = ssub.s32 256, 256
      %26 = vsyncadd [#allocation6], %s25
      %s27 = sshll.u32 [#allocation5], 4
      %s28 = int_to_ptr.vmem [resolvable:$true] %s27
      %33 = dma.hbm_to_vmem [thread:$0]  %s1, 256, %s28, [#allocation6], 128, 128, 8
    $region9: #{tpu_custom_call.1} parent=1 // pred_fallthru
      _
    // Predicated region
    $region10: #{tpu_custom_call.1} parent=1 // pred_check
      _
    $region11: #{tpu_custom_call.1} parent=1 // pred_check_branch
      %35 = sbr.rel (0) target = $region13
    $region12: #{tpu_custom_call.1} parent=1 // pred_region
      %36 = dma.done [#allocation3], 256
    $region13: #{tpu_custom_call.1} parent=1 // pred_fallthru
      _
    // Predicated region
    $region14: #{tpu_custom_call.1} parent=1 // pred_check
      _
    $region15: #{tpu_custom_call.1} parent=1 // pred_check_branch
      %38 = sbr.rel (0) target = $region17
    $region16: #{tpu_custom_call.1} parent=1 // pred_region
      %39 = dma.done [#allocation6], 256
    $region17: #{tpu_custom_call.1} parent=1 // pred_fallthru
      _
    %v40 = vld [vmem:[#allocation2] sm:$0xff]
    %v41 = vld [vmem:[#allocation2 + $0x8] sm:$0xff]
    %v42 = vld [vmem:[#allocation5] sm:$0xff]
    %v43 = vld [vmem:[#allocation5 + $0x8] sm:$0xff]
    %v44 = vsub.f32 %v40, %v42
    %v45 = vsub.f32 %v41, %v43
    %v46 = vmul.f32 %v44, %v44
    %v47 = vmul.f32 %v45, %v45
    %v48 = vadd.f32 %v46, %v47
    %49 = vadd.xlane.f32.xlu0 %v48
    %v50 = vpop.xlane.xlu0 %49
    %v51 = vrot.slane %v50, 4
    %v52 = vadd.f32 %v50, %v51
    %v53 = vrot.slane %v52, 2
    %v54 = vadd.f32 %v52, %v53
    %v55 = vrot.slane %v54, 1
    %v56 = vadd.f32 %v54, %v55
    %s57 = vtos %v56
    %s58 = smul.f32 %s57, 0.00048828125
    %s59 = scalar_lea.smem [#allocation7], 0
    %60 = sst [smem:[%s59]] %s58
    // Predicated region
    $region18: #{tpu_custom_call.1} parent=1 // pred_check
      _
    $region19: #{tpu_custom_call.1} parent=1 // pred_check_branch
      %62 = sbr.rel (0) target = $region21
    $region20: #{tpu_custom_call.1} parent=1 // pred_region
      %s64 = ssub.s32 16, 16
      %65 = vsyncadd [#allocation4], %s64
      %68 = dma.smem_to_hbm [#allocation7], 16, %s2, [#allocation4]
    $region21: #{tpu_custom_call.1} parent=1 // pred_fallthru
      _
    // Predicated region
    $region22: #{tpu_custom_call.1} parent=1 // pred_check
      _
    $region23: #{tpu_custom_call.1} parent=1 // pred_check_branch
      %70 = sbr.rel (0) target = $region25
    $region24: #{tpu_custom_call.1} parent=1 // pred_region
      %71 = dma.done [#allocation4], 16
    $region25: #{tpu_custom_call.1} parent=1 // pred_fallthru
      _
    %72 = sfence
    %73 = vsyncpa [#allocation3], 1
    %74 = vsyncpa [#allocation6], 1
    %75 = vsyncpa [#allocation4], 1

</llo_original>
